<compile_context>
chip_gen: v7x
topology: tpu7x:2x2x1
jax: 0.10.0
libtpu: 0.0.40
codegen_flags: <defaults>
</compile_context>

<pallas_src>
import functools

import jax
import jax.numpy as jnp
from jax.experimental import pallas as pl
from jax.experimental.pallas import tpu as pltpu

_LANE = 128
_MAX_TILE_R = 2048            # 2 inputs x 2 pipeline bufs x 2048x128x4B = 4 MiB
_PALLAS_MIN_ELEMS = 1 << 20   # below this, fused XLA beats kernel launch cost


def _elementwise_smooth_l1(x, y):
    """Per-element SmoothL1 (beta = 1.0) in f32:
         |d| <  1 : 0.5 * d^2
         |d| >= 1 : |d| - 0.5
    """
    d = x.astype(jnp.float32) - y.astype(jnp.float32)
    ad = jnp.abs(d)
    return jnp.where(ad < 1.0, 0.5 * d * d, ad - 0.5)


def _reference(logits, labels):
    return jnp.mean(_elementwise_smooth_l1(logits, labels))


def _smooth_l1_kernel(x_ref, y_ref, o_ref, *, steps_per_chunk, tile_r,
                      n_full_tiles, n_valid, trace_mask):
    c = pl.program_id(0)            # chunk (one per TensorCore on v7x)
    r = pl.program_id(1)            # step within chunk (reduction axis)
    t = c * steps_per_chunk + r     # logical (tile_r, 128) tile index

    @pl.when(r == 0)
    def _init():
        o_ref[...] = jnp.zeros_like(o_ref)

    per = _elementwise_smooth_l1(x_ref[...], y_ref[...])

    def _fold(vals):
        # (tile_r, 128) -> (8, 128): sublane-tile-aligned regrouping, pure VPU.
        return vals.reshape(tile_r // 8, 8, _LANE).sum(axis=0)

    if not trace_mask:
        # Every tile in the grid is fully valid: pure streaming path.
        o_ref[...] += _fold(per)
    else:
        # Steady state: fully valid tiles carry no index math at all.
        @pl.when(t < n_full_tiles)
        def _full_tile():
            o_ref[...] += _fold(per)

        # At most two tiles per call hit this path: the ragged last real tile
        # and (with the 2-chunk split) one phantom tile whose DMA was clamped
        # onto the last real tile; both are masked via the *logical* flat id.
        @pl.when(t >= n_full_tiles)
        def _partial_tile():
            base = t * (tile_r * _LANE)
            row_ids = jax.lax.broadcasted_iota(jnp.int32, (tile_r, _LANE), 0)
            lane_ids = jax.lax.broadcasted_iota(jnp.int32, (tile_r, _LANE), 1)
            flat_ids = base + row_ids * _LANE + lane_ids
            # Keep the select form (NOT a 0/1-mask multiply): out-of-range
            # lanes hold undefined data that may be NaN/Inf.
            o_ref[...] += _fold(jnp.where(flat_ids < n_valid, per, 0.0))


def _sublane_rows(dtype) -> int:
    # Packed sublane granularity: f32 -> 8, bf16/f16 -> 16, int8/fp8 -> 32.
    return max(8, 32 // jnp.dtype(dtype).itemsize)


def _round_up(x: int, m: int) -> int:
    return ((x + m - 1) // m) * m


def huber_loss(logits: jax.Array, labels: jax.Array, *, use_pallas=None):
    """SmoothL1Loss(logits, labels) with mean reduction, matching PyTorch."""
    assert logits.shape == labels.shape, "SmoothL1Loss expects matching shapes"
    n_elem = logits.size

    if use_pallas is None:
        use_pallas = n_elem >= _PALLAS_MIN_ELEMS
    if not use_pallas or n_elem < _LANE:
        # Fused XLA is strictly faster for tiny inputs (launch overhead).
        return _reference(logits, labels)

    x = logits.reshape(-1)
    y = labels.reshape(-1)

    rows = n_elem // _LANE              # lane-aligned prefix rows
    n_prefix = rows * _LANE
    tail = n_elem - n_prefix            # < 128 leftover elements

    # Tail handled by a tiny fused-XLA expression; avoids any jnp.pad
    # full-array HBM copy in front of a bandwidth-bound kernel.
    tail_sum = jnp.float32(0.0)
    if tail:
        tail_sum = jnp.sum(_elementwise_smooth_l1(x[n_prefix:], y[n_prefix:]))

    x2 = x[:n_prefix].reshape(rows, _LANE)
    y2 = y[:n_prefix].reshape(rows, _LANE)

    sublane = max(_sublane_rows(x2.dtype), _sublane_rows(y2.dtype))
    tile_r = min(_MAX_TILE_R, _round_up(rows, sublane))
    n_tiles = pl.cdiv(rows, tile_r)
    n_full_tiles = rows // tile_r

    # Leading "parallel" axis: shards the stream across both TensorCores on
    # v7x; plain sequential iteration on single-TC chips.
    num_chunks = 2 if n_tiles >= 2 else 1
    steps_per_chunk = pl.cdiv(n_tiles, num_chunks)
    total_grid_tiles = num_chunks * steps_per_chunk
    trace_mask = total_grid_tiles != n_full_tiles

    def in_map(c, r):
        t = c * steps_per_chunk + r
        # Clamp phantom tiles (odd tile count split over 2 chunks) onto the
        # last real tile; their contribution is masked to zero in-kernel.
        return (jnp.minimum(t, n_tiles - 1), 0)

    kernel = functools.partial(
        _smooth_l1_kernel,
        steps_per_chunk=steps_per_chunk,
        tile_r=tile_r,
        n_full_tiles=n_full_tiles,
        n_valid=n_prefix,
        trace_mask=trace_mask,
    )

    # Each chunk accumulates into its own (8, 128) f32 output block, resident
    # across the "arbitrary" reduction axis; the final cross-lane reduce and
    # the mean fold happen on this tiny array in the wrapper.
    partials = pl.pallas_call(
        kernel,
        out_shape=jax.ShapeDtypeStruct((num_chunks * 8, _LANE), jnp.float32),
        grid_spec=pltpu.PrefetchScalarGridSpec(
            num_scalar_prefetch=0,
            grid=(num_chunks, steps_per_chunk),
            in_specs=[
                pl.BlockSpec((tile_r, _LANE), in_map),
                pl.BlockSpec((tile_r, _LANE), in_map),
            ],
            out_specs=pl.BlockSpec((8, _LANE), lambda c, r: (c, 0)),
        ),
        compiler_params=pltpu.CompilerParams(
            dimension_semantics=("parallel", "arbitrary"),
            vmem_limit_bytes=32 * 1024 * 1024,
        ),
    )(x2, y2)

    return (jnp.sum(partials) + tail_sum) / jnp.float32(n_elem)


if __name__ == "__main__":
    key = jax.random.PRNGKey(0)
    k1, k2, k3, k4, k5, k6 = jax.random.split(key, 6)

    # Primary demo at the module's implied shape; force the Pallas path so the
    # kernel actually runs (auto-dispatch routes this tiny size to fused XLA).
    logits = jax.random.normal(k1, (2, 4, 16, 16), dtype=jnp.float32)
    labels = jax.random.normal(k2, (2, 4, 16, 16), dtype=jnp.float32)
    out = huber_loss(logits, labels, use_pallas=True)
    jax.block_until_ready(out)
    ref = _reference(logits, labels)
    assert jnp.allclose(out, ref, rtol=1e-5, atol=1e-5), (out, ref)

    # Ragged size (22755 elems): exercises the masked partial tile + the
    # <128-element tail path.
    lg2 = jax.random.normal(k3, (3, 5, 37, 41), dtype=jnp.float32)
    lb2 = jax.random.normal(k4, (3, 5, 37, 41), dtype=jnp.float32)
    out2 = huber_loss(lg2, lb2, use_pallas=True)
    jax.block_until_ready(out2)
    ref2 = _reference(lg2, lb2)
    assert jnp.allclose(out2, ref2, rtol=1e-5, atol=1e-5), (out2, ref2)

    # Multi-tile size: exercises the 2-chunk "parallel" split (both TCs on
    # v7x) plus a partial last tile.
    lg3 = jax.random.normal(k5, (8, 8, 72, 72), dtype=jnp.float32)
    lb3 = jax.random.normal(k6, (8, 8, 72, 72), dtype=jnp.float32)
    out3 = huber_loss(lg3, lb3, use_pallas=True)
    jax.block_until_ready(out3)
    ref3 = _reference(lg3, lb3)
    assert jnp.allclose(out3, ref3, rtol=1e-5, atol=1e-5), (out3, ref3)

    print("KERNEL_OK")
</pallas_src>

<mosaic_0001>
module attributes {stable_mosaic.version = 11 : i64} {
  func.func @_smooth_l1_kernel(%arg0: i32, %arg1: i32, %arg2: memref<16x128xf32, #tpu.memory_space<vmem>>, %arg3: memref<16x128xf32, #tpu.memory_space<vmem>>, %arg4: memref<8x128xf32, #tpu.memory_space<vmem>>) attributes {dimension_semantics = [#tpu.dimension_semantics<parallel>, #tpu.dimension_semantics<arbitrary>], iteration_bounds = array<i64: 1, 1>, scalar_prefetch = 0 : i64, scratch_operands = 0 : i64, tpu.core_type = #tpu.core_type<tc>, window_params = [{transform_indices = @transform_0, window_bounds = array<i64: 16, 128>}, {transform_indices = @transform_1, window_bounds = array<i64: 16, 128>}, {transform_indices = @transform_2, window_bounds = array<i64: 8, 128>}]} {
    %c0_i32 = arith.constant 0 : i32
    %0 = arith.cmpi eq, %arg1, %c0_i32 : i32
    %1 = arith.extui %0 : i1 to i32
    %c0_i32_0 = arith.constant 0 : i32
    %2 = arith.cmpi ne, %1, %c0_i32_0 : i32
    scf.if %2 {
      %cst_11 = arith.constant 0.000000e+00 : f32
      %20 = vector.broadcast %cst_11 : f32 to vector<8x128xf32>
      %c0_12 = arith.constant 0 : index
      %c0_13 = arith.constant 0 : index
      %21 = vector.load %arg4[%c0_12, %c0_13] : memref<8x128xf32, #tpu.memory_space<vmem>>, vector<8x128xf32>
      tpu.vector_store %arg4[%c0_12, %c0_13], %20 {strides = array<i32>} : memref<8x128xf32, #tpu.memory_space<vmem>>, vector<8x128xf32>,
    } else {
    }
    %c0 = arith.constant 0 : index
    %c0_1 = arith.constant 0 : index
    %3 = vector.load %arg2[%c0, %c0_1] : memref<16x128xf32, #tpu.memory_space<vmem>>, vector<16x128xf32>
    %c0_2 = arith.constant 0 : index
    %c0_3 = arith.constant 0 : index
    %4 = vector.load %arg3[%c0_2, %c0_3] : memref<16x128xf32, #tpu.memory_space<vmem>>, vector<16x128xf32>
    %5 = arith.subf %3, %4 : vector<16x128xf32>
    %6 = math.absf %5 : vector<16x128xf32>
    %cst = arith.constant 1.000000e+00 : f32
    %7 = vector.broadcast %cst : f32 to vector<16x128xf32>
    %8 = arith.cmpf olt, %6, %7 : vector<16x128xf32>
    %cst_4 = arith.constant 5.000000e-01 : f32
    %9 = vector.broadcast %cst_4 : f32 to vector<16x128xf32>
    %10 = arith.mulf %9, %5 : vector<16x128xf32>
    %11 = arith.mulf %10, %5 : vector<16x128xf32>
    %cst_5 = arith.constant 5.000000e-01 : f32
    %12 = vector.broadcast %cst_5 : f32 to vector<16x128xf32>
    %13 = arith.subf %6, %12 : vector<16x128xf32>
    %14 = arith.select %8, %11, %13 : vector<16x128xi1>, vector<16x128xf32>
    %c0_6 = arith.constant 0 : index
    %c0_7 = arith.constant 0 : index
    %15 = vector.load %arg4[%c0_6, %c0_7] : memref<8x128xf32, #tpu.memory_space<vmem>>, vector<8x128xf32>
    %16 = vector.shape_cast %14 : vector<16x128xf32> to vector<2x8x128xf32>
    %cst_8 = arith.constant dense<0.000000e+00> : vector<8x128xf32>
    %17 = vector.multi_reduction <add>, %16, %cst_8 [0] : vector<2x8x128xf32> to vector<8x128xf32>
    %18 = arith.addf %15, %17 : vector<8x128xf32>
    %c0_9 = arith.constant 0 : index
    %c0_10 = arith.constant 0 : index
    %19 = vector.load %arg4[%c0_9, %c0_10] : memref<8x128xf32, #tpu.memory_space<vmem>>, vector<8x128xf32>
    tpu.vector_store %arg4[%c0_9, %c0_10], %18 {strides = array<i32>} : memref<8x128xf32, #tpu.memory_space<vmem>>, vector<8x128xf32>,
    return
  }
  func.func @transform_0(%arg0: i32, %arg1: i32) -> (i32, i32) {
    %c1_i32 = arith.constant 1 : i32
    %0 = arith.muli %arg0, %c1_i32 : i32
    %1 = arith.addi %0, %arg1 : i32
    %c0_i32 = arith.constant 0 : i32
    %2 = arith.minsi %1, %c0_i32 : i32
    %c0_i32_0 = arith.constant 0 : i32
    %c0_i32_1 = arith.constant 0 : i32
    return %2, %c0_i32_0 : i32, i32
  }
  func.func @transform_1(%arg0: i32, %arg1: i32) -> (i32, i32) {
    %c1_i32 = arith.constant 1 : i32
    %0 = arith.muli %arg0, %c1_i32 : i32
    %1 = arith.addi %0, %arg1 : i32
    %c0_i32 = arith.constant 0 : i32
    %2 = arith.minsi %1, %c0_i32 : i32
    %c0_i32_0 = arith.constant 0 : i32
    %c0_i32_1 = arith.constant 0 : i32
    return %2, %c0_i32_0 : i32, i32
  }
  func.func @transform_2(%arg0: i32, %arg1: i32) -> (i32, i32) {
    %c0_i32 = arith.constant 0 : i32
    %c0_i32_0 = arith.constant 0 : i32
    return %arg0, %c0_i32 : i32, i32
  }
}

</mosaic_0001>

<llo_original>
// kernel: tpu_custom_call.1
$region0: #{tpu_custom_call.1}
  #allocation0 [shape = 'u32[]', space=smem, size = 0x4, offset = 0x4, fixed_abs, tag = 'smem constant byte address 0x4 - core index']
  #allocation1 [shape = 'u32[144,128]{1,0:T(1,128)}', space=vmem, size = 0x12000, scoped, tag = 'internal scratch']
  %s0 = inlined_call_operand.hbm [shape: f32[16,128], index: 0, kind: input, shape index: {}]
  %s1 = inlined_call_operand.hbm [shape: f32[16,128], index: 1, kind: input, shape index: {}]
  %s2 = inlined_call_operand.hbm [shape: f32[8,128], index: 2, kind: output, shape index: {}]
  %s3 = sld [smem:[#allocation0]]
  $region30: #{tpu_custom_call.1} parent=0
    _
  %s5 = ssub.s32 1, %s3
  %s6 = scalar_select 0, %s5, %s3
  $region1: #{tpu_custom_call.1} parent=0
    #allocation2 [shape = 'u8[8192]{0}', space=vmem, size = 0x2000, scoped, tag = 'input window, operand 0, single buffered']
    #allocation3 [shape = 's32[1]{0}', space=sflag, size = 0x4, scoped, tag = 'scoped memory for tpu_custom_call.1']
    #allocation4 [shape = 's32[1]{0}', space=sflag, size = 0x4, scoped, tag = 'scoped memory for tpu_custom_call.1']
    #allocation5 [shape = 'u8[8192]{0}', space=vmem, size = 0x2000, scoped, tag = 'input window, operand 1, single buffered']
    #allocation6 [shape = 's32[1]{0}', space=sflag, size = 0x4, scoped, tag = 'scoped memory for tpu_custom_call.1']
    #allocation7 [shape = 'u8[4096]{0}', space=vmem, size = 0x1000, scoped, tag = 'output window, operand 0, single buffered']
    %7 = vsyncpa [#allocation3], 0
    %8 = vsyncpa [#allocation6], 0
    %9 = vsyncpa [#allocation4], 0
    // Predicated region
    $region2: #{tpu_custom_call.1} parent=1 // pred_check
      _
    $region3: #{tpu_custom_call.1} parent=1 // pred_check_branch
      %11 = sbr.rel (0) target = $region5
    $region4: #{tpu_custom_call.1} parent=1 // pred_region
      %s12 = sadd.s32 0, 0
      %p13 = scmp.lt.s32.totalorder %s12, 0
      %s14 = scalar_select %p13, %s12, 0
      %s15 = smul.u32 2, %s14
      %s17 = ssub.s32 256, 256
      %18 = vsyncadd [#allocation3], %s17
      %s19 = smul.addr %s15, 128
      %s20 = scalar_lea.hbm %s0, %s19
      %s21 = sshll.u32 [#allocation2], 4
      %s22 = int_to_ptr.vmem [resolvable:$true] %s21
      %27 = dma.hbm_to_vmem [thread:$0]  %s20, 256, %s22, [#allocation3], 128, 128, 8
    $region5: #{tpu_custom_call.1} parent=1 // pred_fallthru
      _
    // Predicated region
    $region6: #{tpu_custom_call.1} parent=1 // pred_check
      _
    $region7: #{tpu_custom_call.1} parent=1 // pred_check_branch
      %29 = sbr.rel (0) target = $region9
    $region8: #{tpu_custom_call.1} parent=1 // pred_region
      %s30 = sadd.s32 0, 0
      %p31 = scmp.lt.s32.totalorder %s30, 0
      %s32 = scalar_select %p31, %s30, 0
      %s33 = smul.u32 2, %s32
      %s35 = ssub.s32 256, 256
      %36 = vsyncadd [#allocation6], %s35
      %s37 = smul.addr %s33, 128
      %s38 = scalar_lea.hbm %s1, %s37
      %s39 = sshll.u32 [#allocation5], 4
      %s40 = int_to_ptr.vmem [resolvable:$true] %s39
      %45 = dma.hbm_to_vmem [thread:$0]  %s38, 256, %s40, [#allocation6], 128, 128, 8
    $region9: #{tpu_custom_call.1} parent=1 // pred_fallthru
      _
    // Predicated region
    $region10: #{tpu_custom_call.1} parent=1 // pred_check
      _
    $region11: #{tpu_custom_call.1} parent=1 // pred_check_branch
      %47 = sbr.rel (0) target = $region13
    $region12: #{tpu_custom_call.1} parent=1 // pred_region
      %48 = dma.done [#allocation3], 256
    $region13: #{tpu_custom_call.1} parent=1 // pred_fallthru
      _
    // Predicated region
    $region14: #{tpu_custom_call.1} parent=1 // pred_check
      _
    $region15: #{tpu_custom_call.1} parent=1 // pred_check_branch
      %50 = sbr.rel (0) target = $region17
    $region16: #{tpu_custom_call.1} parent=1 // pred_region
      %51 = dma.done [#allocation6], 256
    $region17: #{tpu_custom_call.1} parent=1 // pred_fallthru
      _
    %s52 = sadd.s32 0, 0
    %p53 = scmp.lt.s32.totalorder %s52, 0
    %s54 = scalar_select %p53, %s52, 0
    %s55 = smul.u32 2, %s54
    %s56 = sadd.s32 0, 0
    %p57 = scmp.lt.s32.totalorder %s56, 0
    %s58 = scalar_select %p57, %s56, 0
    %s59 = smul.u32 2, %s58
    %p60 = scmp.eq.s32.totalorder 0, 0
    // Predicated region
    $region18: #{tpu_custom_call.1} parent=1 // pred_check
      %p61 = pneg %p60
    $region19: #{tpu_custom_call.1} parent=1 // pred_check_branch
      %63 = sbr.rel (%p61) target = $region21
    $region20: #{tpu_custom_call.1} parent=1 // pred_region
      %64 = vst [vmem:[#allocation7] sm:$0xff] 0.0
    $region21: #{tpu_custom_call.1} parent=1 // pred_fallthru
      _
    %v65 = vld [vmem:[#allocation2] sm:$0xff]
    %v66 = vld [vmem:[#allocation2 + $0x8] sm:$0xff]
    %v67 = vld [vmem:[#allocation5] sm:$0xff]
    %v68 = vld [vmem:[#allocation5 + $0x8] sm:$0xff]
    %v69 = vsub.f32 %v65, %v67
    %v70 = vsub.f32 %v66, %v68
    %v71 = vand.u32 2147483647, %v69
    %v72 = vand.u32 2147483647, %v70
    %vm73 = vcmp.lt.f32.partialorder %v71, 1.0
    %vm74 = vcmp.lt.f32.partialorder %v72, 1.0
    %v75 = vmul.f32 %v69, 0.5
    %v76 = vmul.f32 %v70, 0.5
    %v77 = vmul.f32 %v75, %v69
    %v78 = vmul.f32 %v76, %v70
    %v79 = vsub.f32 %v71, 0.5
    %v80 = vsub.f32 %v72, 0.5
    %v81 = vsel %vm73, %v77, %v79
    %v82 = vsel %vm74, %v78, %v80
    %v83 = vld [vmem:[#allocation7] sm:$0xff]
    %v84 = vadd.f32 %v81, %v82
    %v85 = vadd.f32 %v83, %v84
    %86 = vst [vmem:[#allocation7] sm:$0xff] %v85
    // Predicated region
    $region22: #{tpu_custom_call.1} parent=1 // pred_check
      _
    $region23: #{tpu_custom_call.1} parent=1 // pred_check_branch
      %88 = sbr.rel (0) target = $region25
    $region24: #{tpu_custom_call.1} parent=1 // pred_region
      %s90 = ssub.s32 128, 128
      %91 = vsyncadd [#allocation4], %s90
      %s93 = sshll.u32 [#allocation7], 4
      %s94 = int_to_ptr.vmem [resolvable:$true] %s93
      %96 = dma.vmem_to_hbm [thread:$0]  %s94, 128, %s2, [#allocation4]
    $region25: #{tpu_custom_call.1} parent=1 // pred_fallthru
      _
    // Predicated region
    $region26: #{tpu_custom_call.1} parent=1 // pred_check
      _
    $region27: #{tpu_custom_call.1} parent=1 // pred_check_branch
      %98 = sbr.rel (0) target = $region29
    $region28: #{tpu_custom_call.1} parent=1 // pred_region
      %99 = dma.done [#allocation4], 128
    $region29: #{tpu_custom_call.1} parent=1 // pred_fallthru
      _
    %100 = vsyncpa [#allocation3], 1
    %101 = vsyncpa [#allocation6], 1
    %102 = vsyncpa [#allocation4], 1

</llo_original>
